<compile_context>
chip_gen: v6e
topology: v6e:2x2x1
jax: 0.10.0
libtpu: 0.0.40
codegen_flags: <defaults>
</compile_context>

<pallas_src>
import jax
import jax.numpy as jnp
from jax.experimental import pallas as pl
from jax.experimental.pallas import tpu as pltpu


def _pair(v):
    if isinstance(v, (tuple, list)):
        return (int(v[0]), int(v[1]))
    return (int(v), int(v))


def _cdiv(a, b):
    return -(-a // b)


def _round_up(a, b):
    return _cdiv(a, b) * b


def _vmem_capacity_bytes():
    """Physical VMEM per TensorCore; conservative fallback if query fails."""
    try:
        info = pltpu.get_tpu_info()
        for name in ("vmem_capacity_bytes", "vmem_size_bytes", "vmem_bytes"):
            v = getattr(info, name, None)
            if v:
                return int(v)
    except Exception:
        pass
    return 64 * 1024 * 1024  # v7x per-core size; safe lower bound everywhere


def lp_pool2d(x, norm_type, kernel_size, stride=None, ceil_mode=False, *,
              block_rows=None):
    """LPPool2d forward.  x: (N, C, H, W) -> (N, C, OH, OW) in x.dtype.

    block_rows optionally forces the output-row tile size (used by tests to
    exercise the multi-tile / halo path on small inputs).
    """
    p = float(norm_type)
    kh, kw = _pair(kernel_size)
    sh, sw = _pair(stride) if stride is not None else (kh, kw)
    N, C, H, W = map(int, x.shape)

    if ceil_mode:
        oh = _cdiv(H - kh, sh) + 1
        ow = _cdiv(W - kw, sw) + 1
        # TODO(synk): ceil_mode windows extending past the edge contribute
        # zeros here (clipped-window sum); PyTorch rescales the clipped-window
        # average by the full kh*kw, so those edge outputs differ.
    else:
        oh = (H - kh) // sh + 1
        ow = (W - kw) // sw + 1
    assert oh >= 1 and ow >= 1, "kernel larger than input"

    # Decompose every in-window offset d as g*stride + r; then strided window
    # access becomes unit-stride slices over a "group" axis of the reshaped
    # input.  Only residues r < k are ever used.
    gh, gw = _cdiv(kh, sh), _cdiv(kw, sw)
    Wo = ow + gw - 1
    bsh, bsw = min(sh, kh), min(sw, kw)

    NC = N * C
    ncp = _round_up(NC, 128)              # lane-dense channel axis
    isz = jnp.dtype(x.dtype).itemsize

    use_scratch = not float(p).is_integer()   # pow-once scratch only for fractional p

    # ---------------- per-generation VMEM budget / tile sizing --------------
    phys = _vmem_capacity_bytes()
    budget = min(32 * 1024 * 1024, phys // 3)     # target for all live buffers

    bc = min(ncp, 512)                            # channel (lane) block

    def _rows_from_budget(bc_):
        in_row = bsh * bsw * Wo * bc_ * isz       # one group-row of input block
        out_row = ow * bc_ * isz
        scr_row = bsh * bsw * Wo * bc_ * 4 if use_scratch else 0
        acc_row = ow * bc_ * 4                    # f32 accumulator (halo path)
        a = 2 * in_row + 2 * out_row + scr_row + acc_row
        b = (gh - 1) * (4 * in_row + scr_row)     # halo rows (main + halo spec)
        return max(1, (budget - b) // a)

    t_budget = _rows_from_budget(bc)
    if t_budget < min(oh, 4) and bc > 128:
        bc = 128                                  # very wide rows: shrink lanes first
        t_budget = _rows_from_budget(bc)
    n_c = _cdiv(ncp, bc)                          # ragged last channel block is fine

    if block_rows is not None:
        t_oh = max(1, min(int(block_rows), oh, t_budget))
    else:
        want_ht = _cdiv(4, n_c)                   # aim for >=4 grid steps total
        t_oh = min(t_budget, oh, max(8, _cdiv(oh, want_ht)))
        t_oh = _cdiv(oh, _cdiv(oh, t_oh))         # balance row tiles
    m = gh - 1
    if m > 0 and _cdiv(oh, t_oh) > 1:
        t_oh = _round_up(t_oh, m)                 # halo BlockSpec needs (gh-1) | t_oh
    n_ht = _cdiv(oh, t_oh)
    if n_ht == 1:
        t_oh = oh
    use_halo = (m > 0) and (n_ht > 1)
    t_in = t_oh if use_halo else t_oh + gh - 1    # group rows per main input block

    # ---------------- build the 5-D channels-last view (ONE transpose) ------
    Ho_arr = n_ht * t_oh + gh - 1                 # keeps every block fully in-bounds
    Hp, Wp = Ho_arr * sh, Wo * sw
    xw = x
    pad_h, pad_w = max(0, Hp - H), max(0, Wp - W)
    if pad_h or pad_w:                            # zero padding only ever feeds
        xw = jnp.pad(xw, ((0, 0), (0, 0), (0, pad_h), (0, pad_w)))
    xw = xw[:, :, :Hp, :Wp]                       # (floor-mode tail rows are unused)
    x5 = xw.reshape(N, C, Ho_arr, sh, Wo, sw)
    x5 = jnp.transpose(x5, (3, 5, 2, 4, 0, 1)).reshape(sh, sw, Ho_arr, Wo, NC)
    if ncp > NC:
        x5 = jnp.pad(x5, ((0, 0),) * 4 + ((0, ncp - NC),))

    # ---------------- kernel -------------------------------------------------
    def _ipow(v, n):
        r, b = None, v
        while n:
            if n & 1:
                r = b if r is None else r * b
            n >>= 1
            if n:
                b = b * b
        return r

    def _powp(v):
        v = v.astype(jnp.float32)
        if p == 1.0:
            return v
        if p == 2.0:
            return v * v
        if float(p).is_integer() and p >= 1.0:
            return _ipow(v, int(p))
        return jnp.exp(jnp.log(v) * p)            # fractional p (NaN for negatives)

    def _rootp(s):
        if p == 1.0:
            return s
        if p == 2.0:
            return jnp.sqrt(s)
        return jnp.exp(jnp.log(s) * (1.0 / p))

    def kernel(*refs):
        i = 0
        x_ref = refs[i]; i += 1
        h_ref = None
        if use_halo:
            h_ref = refs[i]; i += 1
        o_ref = refs[i]; i += 1
        xp_ref = None
        if use_scratch:
            xp_ref = refs[i]; i += 1
        acc_ref = refs[i] if use_halo else None

        if use_scratch:
            xp_ref[...] = _powp(x_ref[...])       # pow once per element (fractional p)

            def main_tile(r_h, r_w, lo, hi, g_w):
                return xp_ref[r_h, r_w, lo:hi, g_w:g_w + ow, :]
        else:
            def main_tile(r_h, r_w, lo, hi, g_w):
                return _powp(x_ref[r_h, r_w, lo:hi, g_w:g_w + ow, :])

        if not use_halo:
            # Whole window sum = kh*kw unit-stride shifted adds, f32 value acc.
            acc = None
            for dh in range(kh):
                g_h, r_h = divmod(dh, sh)
                for dw in range(kw):
                    g_w, r_w = divmod(dw, sw)
                    term = main_tile(r_h, r_w, g_h, g_h + t_oh, g_w)
                    acc = term if acc is None else acc + term
            o_ref[...] = _rootp(acc).astype(o_ref.dtype)
        else:
            # Row-tiled path: taps with g_h > 0 split between the main block
            # (top rows) and the halo block (last g_h rows of this row tile).
            first = True
            for dh in range(kh):
                g_h, r_h = divmod(dh, sh)
                for dw in range(kw):
                    g_w, r_w = divmod(dw, sw)
                    if g_h == 0:
                        term = main_tile(r_h, r_w, 0, t_oh, g_w)
                        if first:
                            acc_ref[...] = term
                            first = False
                        else:
                            acc_ref[...] += term
                    else:
                        if t_oh - g_h > 0:
                            acc_ref[0:t_oh - g_h, :, :] += main_tile(
                                r_h, r_w, g_h, t_oh, g_w)
                        acc_ref[t_oh - g_h:t_oh, :, :] += _powp(
                            h_ref[r_h, r_w, 0:g_h, g_w:g_w + ow, :])
            o_ref[...] = _rootp(acc_ref[...]).astype(o_ref.dtype)

    # ---------------- pallas_call --------------------------------------------
    in_specs = [pl.BlockSpec((bsh, bsw, t_in, Wo, bc),
                             lambda ih, ic: (0, 0, ih, 0, ic))]
    args = [x5]
    if use_halo:
        hs = t_oh // m                            # (gh-1) | t_oh guaranteed above
        in_specs.append(pl.BlockSpec((bsh, bsw, m, Wo, bc),
                                     lambda ih, ic: (0, 0, (ih + 1) * hs, 0, ic)))
        args.append(x5)                           # same array, halo view

    scratch_shapes = []
    if use_scratch:
        scratch_shapes.append(pltpu.VMEM((bsh, bsw, t_in, Wo, bc), jnp.float32))
    if use_halo:
        scratch_shapes.append(pltpu.VMEM((t_oh, ow, bc), jnp.float32))

    blk_in = bsh * bsw * t_in * Wo * bc * isz
    blk_halo = bsh * bsw * m * Wo * bc * isz if use_halo else 0
    blk_out = t_oh * ow * bc * isz
    blk_scr = (bsh * bsw * t_in * Wo * bc * 4 if use_scratch else 0) + \
              (t_oh * ow * bc * 4 if use_halo else 0)
    need = 2 * (blk_in + blk_halo + blk_out) + blk_scr
    vmem_limit = int(min(phys * 0.9,
                         max(32 * 1024 * 1024, need + 8 * 1024 * 1024)))

    out = pl.pallas_call(
        kernel,
        out_shape=jax.ShapeDtypeStruct((oh, ow, ncp), x.dtype),
        grid=(n_ht, n_c),
        in_specs=in_specs,
        out_specs=pl.BlockSpec((t_oh, ow, bc), lambda ih, ic: (ih, 0, ic)),
        scratch_shapes=tuple(scratch_shapes),
        compiler_params=pltpu.CompilerParams(
            dimension_semantics=("parallel", "parallel"),
            vmem_limit_bytes=vmem_limit),
    )(*args)

    out = out[:, :, :NC].reshape(oh, ow, N, C).transpose(2, 3, 0, 1)
    return out


def _lp_pool2d_ref(x, norm_type, kernel_size, stride=None):
    """Pure-JAX reference (floor mode) for correctness checking."""
    p = float(norm_type)
    kh, kw = _pair(kernel_size)
    sh, sw = _pair(stride) if stride is not None else (kh, kw)
    xp = jnp.power(x.astype(jnp.float32), p)
    s = jax.lax.reduce_window(xp, 0.0, jax.lax.add,
                              (1, 1, kh, kw), (1, 1, sh, sw), "VALID")
    return jnp.power(s, 1.0 / p).astype(x.dtype)


if __name__ == "__main__":
    key = jax.random.PRNGKey(0)
    k1, k2, k3, k4 = jax.random.split(key, 4)

    # 1) nn.LPPool2d(2, 3, stride=2) on (2, 4, 16, 16)
    x1 = jax.random.normal(k1, (2, 4, 16, 16), dtype=jnp.float32)
    o1 = jax.block_until_ready(lp_pool2d(x1, 2.0, 3, 2))
    r1 = _lp_pool2d_ref(x1, 2.0, 3, 2)
    assert o1.shape == (2, 4, 7, 7), o1.shape
    assert jnp.allclose(o1, r1, rtol=1e-5, atol=1e-5), "mismatch (p=2)"

    # 2) fractional norm 1.2, non-square kernel/stride, forced row tiling (halo path)
    x2 = jax.random.uniform(k2, (2, 4, 33, 21), dtype=jnp.float32,
                            minval=0.05, maxval=1.0)
    o2 = jax.block_until_ready(lp_pool2d(x2, 1.2, (3, 2), (2, 1), block_rows=5))
    r2 = _lp_pool2d_ref(x2, 1.2, (3, 2), (2, 1))
    assert o2.shape == (2, 4, 16, 20), o2.shape
    assert jnp.allclose(o2, r2, rtol=1e-4, atol=1e-5), "mismatch (p=1.2)"

    # 3) integer norm 3, stride 1 (2-row halo), forced row tiling
    x3 = jax.random.uniform(k3, (1, 3, 20, 20), dtype=jnp.float32,
                            minval=0.05, maxval=1.0)
    o3 = jax.block_until_ready(lp_pool2d(x3, 3.0, 3, 1, block_rows=6))
    r3 = _lp_pool2d_ref(x3, 3.0, 3, 1)
    assert o3.shape == (1, 3, 18, 18), o3.shape
    assert jnp.allclose(o3, r3, rtol=1e-4, atol=1e-5), "mismatch (p=3)"

    # 4) bf16 input stays bf16 end-to-end
    x4 = jax.random.normal(k4, (2, 4, 16, 16), dtype=jnp.bfloat16)
    o4 = jax.block_until_ready(lp_pool2d(x4, 2.0, 2))
    r4 = _lp_pool2d_ref(x4, 2.0, 2)
    assert o4.dtype == jnp.bfloat16 and o4.shape == (2, 4, 8, 8)
    assert jnp.allclose(o4.astype(jnp.float32), r4.astype(jnp.float32),
                        rtol=2e-2, atol=2e-2), "mismatch (bf16)"

    print("KERNEL_OK")
</pallas_src>

<mosaic_0001>
module attributes {stable_mosaic.version = 11 : i64} {
  func.func @kernel(%arg0: i32, %arg1: i32, %arg2: memref<2x2x8x8x128xf32, #tpu.memory_space<vmem>>, %arg3: memref<7x7x128xf32, #tpu.memory_space<vmem>>) attributes {dimension_semantics = [#tpu.dimension_semantics<parallel>, #tpu.dimension_semantics<parallel>], iteration_bounds = array<i64: 1, 1>, scalar_prefetch = 0 : i64, scratch_operands = 0 : i64, tpu.core_type = #tpu.core_type<tc>, window_params = [{transform_indices = @transform_0, window_bounds = array<i64: 2, 2, 8, 8, 128>}, {transform_indices = @transform_1, window_bounds = array<i64: 7, 7, 128>}]} {
    %c0 = arith.constant 0 : index
    %c0_0 = arith.constant 0 : index
    %c0_1 = arith.constant 0 : index
    %c0_2 = arith.constant 0 : index
    %c0_3 = arith.constant 0 : index
    %0 = vector.load %arg2[%c0, %c0_0, %c0_1, %c0_2, %c0_3] : memref<2x2x8x8x128xf32, #tpu.memory_space<vmem>>, vector<1x1x7x7x128xf32>
    %1 = vector.shape_cast %0 : vector<1x1x7x7x128xf32> to vector<7x7x128xf32>
    %2 = arith.mulf %1, %1 : vector<7x7x128xf32>
    %c0_4 = arith.constant 0 : index
    %c1 = arith.constant 1 : index
    %c0_5 = arith.constant 0 : index
    %c0_6 = arith.constant 0 : index
    %c0_7 = arith.constant 0 : index
    %3 = vector.load %arg2[%c0_4, %c1, %c0_5, %c0_6, %c0_7] : memref<2x2x8x8x128xf32, #tpu.memory_space<vmem>>, vector<1x1x7x7x128xf32>
    %4 = vector.shape_cast %3 : vector<1x1x7x7x128xf32> to vector<7x7x128xf32>
    %5 = arith.mulf %4, %4 : vector<7x7x128xf32>
    %6 = arith.addf %2, %5 : vector<7x7x128xf32>
    %c0_8 = arith.constant 0 : index
    %c0_9 = arith.constant 0 : index
    %c0_10 = arith.constant 0 : index
    %c1_11 = arith.constant 1 : index
    %c0_12 = arith.constant 0 : index
    %7 = vector.load %arg2[%c0_8, %c0_9, %c0_10, %c1_11, %c0_12] : memref<2x2x8x8x128xf32, #tpu.memory_space<vmem>>, vector<1x1x7x7x128xf32>
    %8 = vector.shape_cast %7 : vector<1x1x7x7x128xf32> to vector<7x7x128xf32>
    %9 = arith.mulf %8, %8 : vector<7x7x128xf32>
    %10 = arith.addf %6, %9 : vector<7x7x128xf32>
    %c1_13 = arith.constant 1 : index
    %c0_14 = arith.constant 0 : index
    %c0_15 = arith.constant 0 : index
    %c0_16 = arith.constant 0 : index
    %c0_17 = arith.constant 0 : index
    %11 = vector.load %arg2[%c1_13, %c0_14, %c0_15, %c0_16, %c0_17] : memref<2x2x8x8x128xf32, #tpu.memory_space<vmem>>, vector<1x1x7x7x128xf32>
    %12 = vector.shape_cast %11 : vector<1x1x7x7x128xf32> to vector<7x7x128xf32>
    %13 = arith.mulf %12, %12 : vector<7x7x128xf32>
    %14 = arith.addf %10, %13 : vector<7x7x128xf32>
    %c1_18 = arith.constant 1 : index
    %c1_19 = arith.constant 1 : index
    %c0_20 = arith.constant 0 : index
    %c0_21 = arith.constant 0 : index
    %c0_22 = arith.constant 0 : index
    %15 = vector.load %arg2[%c1_18, %c1_19, %c0_20, %c0_21, %c0_22] : memref<2x2x8x8x128xf32, #tpu.memory_space<vmem>>, vector<1x1x7x7x128xf32>
    %16 = vector.shape_cast %15 : vector<1x1x7x7x128xf32> to vector<7x7x128xf32>
    %17 = arith.mulf %16, %16 : vector<7x7x128xf32>
    %18 = arith.addf %14, %17 : vector<7x7x128xf32>
    %c1_23 = arith.constant 1 : index
    %c0_24 = arith.constant 0 : index
    %c0_25 = arith.constant 0 : index
    %c1_26 = arith.constant 1 : index
    %c0_27 = arith.constant 0 : index
    %19 = vector.load %arg2[%c1_23, %c0_24, %c0_25, %c1_26, %c0_27] : memref<2x2x8x8x128xf32, #tpu.memory_space<vmem>>, vector<1x1x7x7x128xf32>
    %20 = vector.shape_cast %19 : vector<1x1x7x7x128xf32> to vector<7x7x128xf32>
    %21 = arith.mulf %20, %20 : vector<7x7x128xf32>
    %22 = arith.addf %18, %21 : vector<7x7x128xf32>
    %c0_28 = arith.constant 0 : index
    %c0_29 = arith.constant 0 : index
    %c1_30 = arith.constant 1 : index
    %c0_31 = arith.constant 0 : index
    %c0_32 = arith.constant 0 : index
    %23 = vector.load %arg2[%c0_28, %c0_29, %c1_30, %c0_31, %c0_32] : memref<2x2x8x8x128xf32, #tpu.memory_space<vmem>>, vector<1x1x7x7x128xf32>
    %24 = vector.shape_cast %23 : vector<1x1x7x7x128xf32> to vector<7x7x128xf32>
    %25 = arith.mulf %24, %24 : vector<7x7x128xf32>
    %26 = arith.addf %22, %25 : vector<7x7x128xf32>
    %c0_33 = arith.constant 0 : index
    %c1_34 = arith.constant 1 : index
    %c1_35 = arith.constant 1 : index
    %c0_36 = arith.constant 0 : index
    %c0_37 = arith.constant 0 : index
    %27 = vector.load %arg2[%c0_33, %c1_34, %c1_35, %c0_36, %c0_37] : memref<2x2x8x8x128xf32, #tpu.memory_space<vmem>>, vector<1x1x7x7x128xf32>
    %28 = vector.shape_cast %27 : vector<1x1x7x7x128xf32> to vector<7x7x128xf32>
    %29 = arith.mulf %28, %28 : vector<7x7x128xf32>
    %30 = arith.addf %26, %29 : vector<7x7x128xf32>
    %c0_38 = arith.constant 0 : index
    %c0_39 = arith.constant 0 : index
    %c1_40 = arith.constant 1 : index
    %c1_41 = arith.constant 1 : index
    %c0_42 = arith.constant 0 : index
    %31 = vector.load %arg2[%c0_38, %c0_39, %c1_40, %c1_41, %c0_42] : memref<2x2x8x8x128xf32, #tpu.memory_space<vmem>>, vector<1x1x7x7x128xf32>
    %32 = vector.shape_cast %31 : vector<1x1x7x7x128xf32> to vector<7x7x128xf32>
    %33 = arith.mulf %32, %32 : vector<7x7x128xf32>
    %34 = arith.addf %30, %33 : vector<7x7x128xf32>
    %35 = math.sqrt %34 : vector<7x7x128xf32>
    %c0_43 = arith.constant 0 : index
    %c0_44 = arith.constant 0 : index
    %c0_45 = arith.constant 0 : index
    %36 = vector.load %arg3[%c0_43, %c0_44, %c0_45] : memref<7x7x128xf32, #tpu.memory_space<vmem>>, vector<7x7x128xf32>
    tpu.vector_store %arg3[%c0_43, %c0_44, %c0_45], %35 {strides = array<i32>} : memref<7x7x128xf32, #tpu.memory_space<vmem>>, vector<7x7x128xf32>,
    return
  }
  func.func @transform_0(%arg0: i32, %arg1: i32) -> (i32, i32, i32, i32, i32) {
    %c0_i32 = arith.constant 0 : i32
    %c0_i32_0 = arith.constant 0 : i32
    %c0_i32_1 = arith.constant 0 : i32
    %c0_i32_2 = arith.constant 0 : i32
    return %c0_i32, %c0_i32_0, %arg0, %c0_i32_1, %arg1 : i32, i32, i32, i32, i32
  }
  func.func @transform_1(%arg0: i32, %arg1: i32) -> (i32, i32, i32) {
    %c0_i32 = arith.constant 0 : i32
    %c0_i32_0 = arith.constant 0 : i32
    return %arg0, %c0_i32, %arg1 : i32, i32, i32
  }
}

</mosaic_0001>

<llo_original>
// kernel: tpu_custom_call.1
$region0: #{tpu_custom_call.1}
  #allocation0 [shape = 'u32[]', space=smem, size = 0x4, offset = 0x4, fixed_abs, tag = 'smem constant byte address 0x4 - core index']
  #allocation1 [shape = 'u32[144,128]{1,0:T(1,128)}', space=vmem, size = 0x12000, scoped, tag = 'internal scratch']
  %s0 = inlined_call_operand.hbm [shape: f32[2,2,8,8,128], index: 0, kind: input, shape index: {}]
  %s1 = inlined_call_operand.hbm [shape: f32[7,7,128], index: 1, kind: output, shape index: {}]
  %s2 = sld [smem:[#allocation0]]
  $region18: #{tpu_custom_call.1} parent=0
    _
  %s4 = ssub.s32 1, %s2
  %s5 = scalar_select 0, %s4, %s2
  $region1: #{tpu_custom_call.1} parent=0
    #allocation2 [shape = 'u8[131072]{0}', space=vmem, size = 0x20000, scoped, tag = 'input window, operand 0, single buffered']
    #allocation3 [shape = 's32[1]{0}', space=sflag, size = 0x4, scoped, tag = 'scoped memory for tpu_custom_call.1']
    #allocation4 [shape = 's32[1]{0}', space=sflag, size = 0x4, scoped, tag = 'scoped memory for tpu_custom_call.1']
    #allocation5 [shape = 'u8[28672]{0}', space=vmem, size = 0x7000, scoped, tag = 'output window, operand 0, single buffered']
    %6 = vsyncpa [#allocation3], 0
    %7 = vsyncpa [#allocation4], 0
    // Predicated region
    $region2: #{tpu_custom_call.1} parent=1 // pred_check
      _
    $region3: #{tpu_custom_call.1} parent=1 // pred_check_branch
      %9 = sbr.rel (0) target = $region5
    $region4: #{tpu_custom_call.1} parent=1 // pred_region
      %s11 = ssub.s32 4096, 4096
      %12 = vsyncadd [#allocation3], %s11
      %s13 = sshll.u32 [#allocation2], 4
      %s14 = int_to_ptr.vmem [resolvable:$true] %s13
      %19 = dma.hbm_to_vmem [thread:$0]  %s0, 4096, %s14, [#allocation3], 128, 128, 8
    $region5: #{tpu_custom_call.1} parent=1 // pred_fallthru
      _
    // Predicated region
    $region6: #{tpu_custom_call.1} parent=1 // pred_check
      _
    $region7: #{tpu_custom_call.1} parent=1 // pred_check_branch
      %21 = sbr.rel (0) target = $region9
    $region8: #{tpu_custom_call.1} parent=1 // pred_region
      %22 = dma.done [#allocation3], 4096
    $region9: #{tpu_custom_call.1} parent=1 // pred_fallthru
      _
    %v23 = vld [vmem:[#allocation2] sm:$0x7f]
    %v24 = vld [vmem:[#allocation2 + $0x8] sm:$0x7f]
    %v25 = vld [vmem:[#allocation2 + $0x10] sm:$0x7f]
    %v26 = vld [vmem:[#allocation2 + $0x18] sm:$0x7f]
    %v27 = vld [vmem:[#allocation2 + $0x20] sm:$0x7f]
    %v28 = vld [vmem:[#allocation2 + $0x28] sm:$0x7f]
    %v29 = vld [vmem:[#allocation2 + $0x30] sm:$0x7f]
    %v30 = vmul.f32 %v23, %v23
    %v31 = vmul.f32 %v24, %v24
    %v32 = vmul.f32 %v25, %v25
    %v33 = vmul.f32 %v26, %v26
    %v34 = vmul.f32 %v27, %v27
    %v35 = vmul.f32 %v28, %v28
    %v36 = vmul.f32 %v29, %v29
    %s37 = scalar_lea.vmem [#allocation2], 64
    %v38 = vld [vmem:[%s37] sm:$0x7f]
    %v39 = vld [vmem:[%s37 + $0x8] sm:$0x7f]
    %v40 = vld [vmem:[%s37 + $0x10] sm:$0x7f]
    %v41 = vld [vmem:[%s37 + $0x18] sm:$0x7f]
    %v42 = vld [vmem:[%s37 + $0x20] sm:$0x7f]
    %v43 = vld [vmem:[%s37 + $0x28] sm:$0x7f]
    %v44 = vld [vmem:[%s37 + $0x30] sm:$0x7f]
    %v45 = vmul.f32 %v38, %v38
    %v46 = vmul.f32 %v39, %v39
    %v47 = vmul.f32 %v40, %v40
    %v48 = vmul.f32 %v41, %v41
    %v49 = vmul.f32 %v42, %v42
    %v50 = vmul.f32 %v43, %v43
    %v51 = vmul.f32 %v44, %v44
    %v52 = vadd.f32 %v30, %v45
    %v53 = vadd.f32 %v31, %v46
    %v54 = vadd.f32 %v32, %v47
    %v55 = vadd.f32 %v33, %v48
    %v56 = vadd.f32 %v34, %v49
    %v57 = vadd.f32 %v35, %v50
    %v58 = vadd.f32 %v36, %v51
    %v59 = vld [vmem:[#allocation2 + $0x1] sm:$0x7f]
    %v60 = vld [vmem:[#allocation2 + $0x9] sm:$0x7f]
    %v61 = vld [vmem:[#allocation2 + $0x11] sm:$0x7f]
    %v62 = vld [vmem:[#allocation2 + $0x19] sm:$0x7f]
    %v63 = vld [vmem:[#allocation2 + $0x21] sm:$0x7f]
    %v64 = vld [vmem:[#allocation2 + $0x29] sm:$0x7f]
    %v65 = vld [vmem:[#allocation2 + $0x31] sm:$0x7f]
    %v66 = vmul.f32 %v59, %v59
    %v67 = vmul.f32 %v60, %v60
    %v68 = vmul.f32 %v61, %v61
    %v69 = vmul.f32 %v62, %v62
    %v70 = vmul.f32 %v63, %v63
    %v71 = vmul.f32 %v64, %v64
    %v72 = vmul.f32 %v65, %v65
    %v73 = vadd.f32 %v52, %v66
    %v74 = vadd.f32 %v53, %v67
    %v75 = vadd.f32 %v54, %v68
    %v76 = vadd.f32 %v55, %v69
    %v77 = vadd.f32 %v56, %v70
    %v78 = vadd.f32 %v57, %v71
    %v79 = vadd.f32 %v58, %v72
    %s80 = scalar_lea.vmem [#allocation2], 128
    %v81 = vld [vmem:[%s80] sm:$0x7f]
    %v82 = vld [vmem:[%s80 + $0x8] sm:$0x7f]
    %v83 = vld [vmem:[%s80 + $0x10] sm:$0x7f]
    %v84 = vld [vmem:[%s80 + $0x18] sm:$0x7f]
    %v85 = vld [vmem:[%s80 + $0x20] sm:$0x7f]
    %v86 = vld [vmem:[%s80 + $0x28] sm:$0x7f]
    %v87 = vld [vmem:[%s80 + $0x30] sm:$0x7f]
    %v88 = vmul.f32 %v81, %v81
    %v89 = vmul.f32 %v82, %v82
    %v90 = vmul.f32 %v83, %v83
    %v91 = vmul.f32 %v84, %v84
    %v92 = vmul.f32 %v85, %v85
    %v93 = vmul.f32 %v86, %v86
    %v94 = vmul.f32 %v87, %v87
    %v95 = vadd.f32 %v73, %v88
    %v96 = vadd.f32 %v74, %v89
    %v97 = vadd.f32 %v75, %v90
    %v98 = vadd.f32 %v76, %v91
    %v99 = vadd.f32 %v77, %v92
    %v100 = vadd.f32 %v78, %v93
    %v101 = vadd.f32 %v79, %v94
    %s102 = scalar_lea.vmem [#allocation2], 192
    %v103 = vld [vmem:[%s102] sm:$0x7f]
    %v104 = vld [vmem:[%s102 + $0x8] sm:$0x7f]
    %v105 = vld [vmem:[%s102 + $0x10] sm:$0x7f]
    %v106 = vld [vmem:[%s102 + $0x18] sm:$0x7f]
    %v107 = vld [vmem:[%s102 + $0x20] sm:$0x7f]
    %v108 = vld [vmem:[%s102 + $0x28] sm:$0x7f]
    %v109 = vld [vmem:[%s102 + $0x30] sm:$0x7f]
    %v110 = vmul.f32 %v103, %v103
    %v111 = vmul.f32 %v104, %v104
    %v112 = vmul.f32 %v105, %v105
    %v113 = vmul.f32 %v106, %v106
    %v114 = vmul.f32 %v107, %v107
    %v115 = vmul.f32 %v108, %v108
    %v116 = vmul.f32 %v109, %v109
    %v117 = vadd.f32 %v95, %v110
    %v118 = vadd.f32 %v96, %v111
    %v119 = vadd.f32 %v97, %v112
    %v120 = vadd.f32 %v98, %v113
    %v121 = vadd.f32 %v99, %v114
    %v122 = vadd.f32 %v100, %v115
    %v123 = vadd.f32 %v101, %v116
    %v124 = vld [vmem:[%s80 + $0x1] sm:$0x7f]
    %v125 = vld [vmem:[%s80 + $0x9] sm:$0x7f]
    %v126 = vld [vmem:[%s80 + $0x11] sm:$0x7f]
    %v127 = vld [vmem:[%s80 + $0x19] sm:$0x7f]
    %v128 = vld [vmem:[%s80 + $0x21] sm:$0x7f]
    %v129 = vld [vmem:[%s80 + $0x29] sm:$0x7f]
    %v130 = vld [vmem:[%s80 + $0x31] sm:$0x7f]
    %v131 = vmul.f32 %v124, %v124
    %v132 = vmul.f32 %v125, %v125
    %v133 = vmul.f32 %v126, %v126
    %v134 = vmul.f32 %v127, %v127
    %v135 = vmul.f32 %v128, %v128
    %v136 = vmul.f32 %v129, %v129
    %v137 = vmul.f32 %v130, %v130
    %v138 = vadd.f32 %v117, %v131
    %v139 = vadd.f32 %v118, %v132
    %v140 = vadd.f32 %v119, %v133
    %v141 = vadd.f32 %v120, %v134
    %v142 = vadd.f32 %v121, %v135
    %v143 = vadd.f32 %v122, %v136
    %v144 = vadd.f32 %v123, %v137
    %s145 = scalar_lea.vmem [#allocation2], 8
    %v146 = vld [vmem:[%s145] sm:$0x7f]
    %v147 = vld [vmem:[%s145 + $0x8] sm:$0x7f]
    %v148 = vld [vmem:[%s145 + $0x10] sm:$0x7f]
    %v149 = vld [vmem:[%s145 + $0x18] sm:$0x7f]
    %v150 = vld [vmem:[%s145 + $0x20] sm:$0x7f]
    %v151 = vld [vmem:[%s145 + $0x28] sm:$0x7f]
    %v152 = vld [vmem:[%s145 + $0x30] sm:$0x7f]
    %v153 = vmul.f32 %v146, %v146
    %v154 = vmul.f32 %v147, %v147
    %v155 = vmul.f32 %v148, %v148
    %v156 = vmul.f32 %v149, %v149
    %v157 = vmul.f32 %v150, %v150
    %v158 = vmul.f32 %v151, %v151
    %v159 = vmul.f32 %v152, %v152
    %v160 = vadd.f32 %v138, %v153
    %v161 = vadd.f32 %v139, %v154
    %v162 = vadd.f32 %v140, %v155
    %v163 = vadd.f32 %v141, %v156
    %v164 = vadd.f32 %v142, %v157
    %v165 = vadd.f32 %v143, %v158
    %v166 = vadd.f32 %v144, %v159
    %s167 = scalar_lea.vmem [#allocation2], 72
    %v168 = vld [vmem:[%s167] sm:$0x7f]
    %v169 = vld [vmem:[%s167 + $0x8] sm:$0x7f]
    %v170 = vld [vmem:[%s167 + $0x10] sm:$0x7f]
    %v171 = vld [vmem:[%s167 + $0x18] sm:$0x7f]
    %v172 = vld [vmem:[%s167 + $0x20] sm:$0x7f]
    %v173 = vld [vmem:[%s167 + $0x28] sm:$0x7f]
    %v174 = vld [vmem:[%s167 + $0x30] sm:$0x7f]
    %v175 = vmul.f32 %v168, %v168
    %v176 = vmul.f32 %v169, %v169
    %v177 = vmul.f32 %v170, %v170
    %v178 = vmul.f32 %v171, %v171
    %v179 = vmul.f32 %v172, %v172
    %v180 = vmul.f32 %v173, %v173
    %v181 = vmul.f32 %v174, %v174
    %v182 = vadd.f32 %v160, %v175
    %v183 = vadd.f32 %v161, %v176
    %v184 = vadd.f32 %v162, %v177
    %v185 = vadd.f32 %v163, %v178
    %v186 = vadd.f32 %v164, %v179
    %v187 = vadd.f32 %v165, %v180
    %v188 = vadd.f32 %v166, %v181
    %v189 = vld [vmem:[%s145 + $0x1] sm:$0x7f]
    %v190 = vld [vmem:[%s145 + $0x9] sm:$0x7f]
    %v191 = vld [vmem:[%s145 + $0x11] sm:$0x7f]
    %v192 = vld [vmem:[%s145 + $0x19] sm:$0x7f]
    %v193 = vld [vmem:[%s145 + $0x21] sm:$0x7f]
    %v194 = vld [vmem:[%s145 + $0x29] sm:$0x7f]
    %v195 = vld [vmem:[%s145 + $0x31] sm:$0x7f]
    %v196 = vmul.f32 %v189, %v189
    %v197 = vmul.f32 %v190, %v190
    %v198 = vmul.f32 %v191, %v191
    %v199 = vmul.f32 %v192, %v192
    %v200 = vmul.f32 %v193, %v193
    %v201 = vmul.f32 %v194, %v194
    %v202 = vmul.f32 %v195, %v195
    %v203 = vadd.f32 %v182, %v196
    %v204 = vadd.f32 %v183, %v197
    %v205 = vadd.f32 %v184, %v198
    %v206 = vadd.f32 %v185, %v199
    %v207 = vadd.f32 %v186, %v200
    %v208 = vadd.f32 %v187, %v201
    %v209 = vadd.f32 %v188, %v202
    %v210 = vrsqrt.pop %v203
    %v211 = vmul.f32 %v203, %v210
    %vm212 = vcmp.eq.f32.partialorder %v203, inf
    %v213 = vsel %vm212, %v203, %v211
    %vm214 = vcmp.eq.f32.partialorder %v203, 0.0
    %v215 = vand.u32 %v203, 2147483648
    %v216 = vsel %vm214, %v215, %v213
    %v217 = vrsqrt.pop %v204
    %v218 = vmul.f32 %v204, %v217
    %vm219 = vcmp.eq.f32.partialorder %v204, inf
    %v220 = vsel %vm219, %v204, %v218
    %vm221 = vcmp.eq.f32.partialorder %v204, 0.0
    %v222 = vand.u32 %v204, 2147483648
    %v223 = vsel %vm221, %v222, %v220
    %v224 = vrsqrt.pop %v205
    %v225 = vmul.f32 %v205, %v224
    %vm226 = vcmp.eq.f32.partialorder %v205, inf
    %v227 = vsel %vm226, %v205, %v225
    %vm228 = vcmp.eq.f32.partialorder %v205, 0.0
    %v229 = vand.u32 %v205, 2147483648
    %v230 = vsel %vm228, %v229, %v227
    %v231 = vrsqrt.pop %v206
    %v232 = vmul.f32 %v206, %v231
    %vm233 = vcmp.eq.f32.partialorder %v206, inf
    %v234 = vsel %vm233, %v206, %v232
    %vm235 = vcmp.eq.f32.partialorder %v206, 0.0
    %v236 = vand.u32 %v206, 2147483648
    %v237 = vsel %vm235, %v236, %v234
    %v238 = vrsqrt.pop %v207
    %v239 = vmul.f32 %v207, %v238
    %vm240 = vcmp.eq.f32.partialorder %v207, inf
    %v241 = vsel %vm240, %v207, %v239
    %vm242 = vcmp.eq.f32.partialorder %v207, 0.0
    %v243 = vand.u32 %v207, 2147483648
    %v244 = vsel %vm242, %v243, %v241
    %v245 = vrsqrt.pop %v208
    %v246 = vmul.f32 %v208, %v245
    %vm247 = vcmp.eq.f32.partialorder %v208, inf
    %v248 = vsel %vm247, %v208, %v246
    %vm249 = vcmp.eq.f32.partialorder %v208, 0.0
    %v250 = vand.u32 %v208, 2147483648
    %v251 = vsel %vm249, %v250, %v248
    %v252 = vrsqrt.pop %v209
    %v253 = vmul.f32 %v209, %v252
    %vm254 = vcmp.eq.f32.partialorder %v209, inf
    %v255 = vsel %vm254, %v209, %v253
    %vm256 = vcmp.eq.f32.partialorder %v209, 0.0
    %v257 = vand.u32 %v209, 2147483648
    %v258 = vsel %vm256, %v257, %v255
    %259 = vst [vmem:[#allocation5] sm:$0x7f] %v216
    %260 = vst [vmem:[#allocation5 + $0x8] sm:$0x7f] %v223
    %261 = vst [vmem:[#allocation5 + $0x10] sm:$0x7f] %v230
    %262 = vst [vmem:[#allocation5 + $0x18] sm:$0x7f] %v237
    %263 = vst [vmem:[#allocation5 + $0x20] sm:$0x7f] %v244
    %264 = vst [vmem:[#allocation5 + $0x28] sm:$0x7f] %v251
    %265 = vst [vmem:[#allocation5 + $0x30] sm:$0x7f] %v258
    // Predicated region
    $region10: #{tpu_custom_call.1} parent=1 // pred_check
      _
    $region11: #{tpu_custom_call.1} parent=1 // pred_check_branch
      %267 = sbr.rel (0) target = $region13
    $region12: #{tpu_custom_call.1} parent=1 // pred_region
      %s269 = ssub.s32 896, 896
      %270 = vsyncadd [#allocation4], %s269
      %s271 = sshll.u32 [#allocation5], 4
      %s272 = int_to_ptr.vmem [resolvable:$true] %s271
      %277 = dma.vmem_to_hbm [thread:$0]  %s272, 896, %s1, [#allocation4], 128, 128, 8
    $region13: #{tpu_custom_call.1} parent=1 // pred_fallthru
      _
    // Predicated region
    $region14: #{tpu_custom_call.1} parent=1 // pred_check
      _
    $region15: #{tpu_custom_call.1} parent=1 // pred_check_branch
      %279 = sbr.rel (0) target = $region17
    $region16: #{tpu_custom_call.1} parent=1 // pred_region
      %280 = dma.done [#allocation4], 896
    $region17: #{tpu_custom_call.1} parent=1 // pred_fallthru
      _
    %281 = vsyncpa [#allocation3], 1
    %282 = vsyncpa [#allocation4], 1

</llo_original>
